<compile_context>
chip_gen: v5e
topology: v5e:2x2
jax: 0.10.0
libtpu: 0.0.40
codegen_flags: <defaults>
</compile_context>

<pallas_src>
import jax
import jax.numpy as jnp
from jax.experimental import pallas as pl
from jax.experimental.pallas import tpu as pltpu

WIDTH = 10
HIDLAY = 5
IN_DIM = 10
LANES = 128
PACK = LANES // IN_DIM          # 12 samples per packed row (120 of 128 lanes used)
PACKED_DIM = PACK * IN_DIM      # 120
MAX_TILE_ROWS = 512             # packed rows per grid step (512 * 12 = 6144 samples)
PALLAS_MIN_BATCH = 1024         # below this, the plain jnp path wins


def _round_up(n, m):
    return ((n + m - 1) // m) * m


# ---------------------------------------------------------------------------
# Kernel: every dot is a full 128-wide MXU matmul thanks to block-diag packing.
# ---------------------------------------------------------------------------
def mlp_kernel(x_ref, w0_ref, b0_ref, wh_ref, bh_ref, wf_ref, bf_ref, o_ref):
    # Initial layer: Linear(10 -> width), no activation (matches the Sequential).
    h = jnp.dot(x_ref[...], w0_ref[...], preferred_element_type=jnp.float32) + b0_ref[...]
    # Hidden layers: [Linear(width, width) + ReLU] x HIDLAY (static unroll).
    for i in range(HIDLAY):
        h = jnp.dot(h, wh_ref[i], preferred_element_type=jnp.float32) + bh_ref[i]
        h = jnp.maximum(h, 0.0)
    # Final layer: Linear(width -> 1), packed so sample i's scalar lands in lane i.
    # Output slab is full 128 lanes -> unmasked, lane-dense stores.
    o_ref[...] = jnp.dot(h, wf_ref[...], preferred_element_type=jnp.float32) + bf_ref[...]


# ---------------------------------------------------------------------------
# Parameters (PyTorch layout: W is (out, in))
# ---------------------------------------------------------------------------
def make_params(key):
    """Deterministic PyTorch-style init: U(-1/sqrt(fan_in), 1/sqrt(fan_in))."""
    ks = jax.random.split(key, 6)

    def lin(k, fan_in, fan_out):
        kw, kb = jax.random.split(k)
        bound = 1.0 / jnp.sqrt(jnp.float32(fan_in))
        w = jax.random.uniform(kw, (fan_out, fan_in), jnp.float32, -bound, bound)
        b = jax.random.uniform(kb, (fan_out,), jnp.float32, -bound, bound)
        return w, b

    w0, b0 = lin(ks[0], IN_DIM, WIDTH)
    wh_list, bh_list = [], []
    for i in range(HIDLAY):
        w, b = lin(ks[1 + i], WIDTH, WIDTH)
        wh_list.append(w)
        bh_list.append(b)
    wf, bf = lin(ks[5], WIDTH, 1)
    return w0, b0, jnp.stack(wh_list), jnp.stack(bh_list), wf, bf


def prepare_kernel_params(params):
    """One-time layout plumbing: expand each layer into 128x128 block-diagonal form
    so PACK=12 samples are processed per lane-row.  Do this once, not per call."""
    w0, b0, wh, bh, wf, bf = params
    eye = jnp.eye(PACK, dtype=jnp.float32)
    pad_feat = LANES - PACKED_DIM          # 8
    pad_out = LANES - PACK                 # 116

    def pack_square(w_torch):              # (out, in) = (10, 10)
        blk = jnp.kron(eye, jnp.transpose(w_torch))            # (120, 120) in (in, out)
        return jnp.pad(blk, ((0, pad_feat), (0, pad_feat)))    # (128, 128)

    def pack_bias(b):                       # (10,)
        row = jnp.tile(b, (PACK,))                              # (120,)
        return jnp.pad(row, (0, pad_feat)).reshape(1, LANES)    # (1, 128)

    w0_blk = pack_square(w0)
    b0_blk = pack_bias(b0)
    wh_blk = jnp.stack([pack_square(wh[i]) for i in range(HIDLAY)])   # (5, 128, 128)
    bh_blk = jnp.stack([pack_bias(bh[i]) for i in range(HIDLAY)])     # (5, 1, 128)
    # Final layer: column i picks up the 10 features of packed sample i.
    wf_col = jnp.kron(eye, jnp.transpose(wf))                          # (120, 12)
    wf_blk = jnp.pad(wf_col, ((0, pad_feat), (0, pad_out)))            # (128, 128)
    bf_blk = jnp.pad(jnp.full((PACK,), bf[0], jnp.float32),
                     (0, pad_out)).reshape(1, LANES)                   # (1, 128)
    return w0_blk, b0_blk, wh_blk, bh_blk, wf_blk, bf_blk


# ---------------------------------------------------------------------------
# Forward passes
# ---------------------------------------------------------------------------
def neural_network_forward_pallas(x, kparams):
    w0_blk, b0_blk, wh_blk, bh_blk, wf_blk, bf_blk = kparams
    batch = x.shape[0]
    x2 = x.reshape(batch, -1).astype(jnp.float32)        # nn.Flatten -> (batch, 10)

    # Pack 12 samples per 128-lane row; pad rows so the grid tiles evenly.
    rows = pl.cdiv(batch, PACK)
    tr = min(MAX_TILE_ROWS, _round_up(rows, 8))
    rows_padded = _round_up(rows, tr)
    samples_padded = rows_padded * PACK

    x2 = jnp.pad(x2, ((0, samples_padded - batch), (0, 0)))
    xp = x2.reshape(rows_padded, PACKED_DIM)              # (R, 120)
    xp = jnp.pad(xp, ((0, 0), (0, LANES - PACKED_DIM)))   # (R, 128), lane-dense

    grid = rows_padded // tr
    flops = 2 * rows_padded * LANES * LANES * (HIDLAY + 2)
    bytes_accessed = (xp.size + sum(a.size for a in kparams) + rows_padded * LANES) * 4

    out = pl.pallas_call(
        mlp_kernel,
        out_shape=jax.ShapeDtypeStruct((rows_padded, LANES), jnp.float32),
        grid=(grid,),
        in_specs=[
            # Streamed activation tile (double-buffered by Pallas).
            pl.BlockSpec((tr, LANES), lambda i: (i, 0)),
            # Packed weights / biases: same block every step -> VMEM-resident.
            pl.BlockSpec((LANES, LANES), lambda i: (0, 0)),
            pl.BlockSpec((1, LANES), lambda i: (0, 0)),
            pl.BlockSpec((HIDLAY, LANES, LANES), lambda i: (0, 0, 0)),
            pl.BlockSpec((HIDLAY, 1, LANES), lambda i: (0, 0, 0)),
            pl.BlockSpec((LANES, LANES), lambda i: (0, 0)),
            pl.BlockSpec((1, LANES), lambda i: (0, 0)),
        ],
        out_specs=pl.BlockSpec((tr, LANES), lambda i: (i, 0)),
        compiler_params=pltpu.CompilerParams(dimension_semantics=("parallel",)),
        cost_estimate=pl.CostEstimate(flops=flops, transcendentals=0,
                                      bytes_accessed=bytes_accessed),
    )(xp, w0_blk, b0_blk, wh_blk, bh_blk, wf_blk, bf_blk)

    # Lanes 0..PACK-1 of each row hold the 12 per-sample scalars, in sample order.
    return out[:, :PACK].reshape(-1, 1)[:batch]


def neural_network_forward_jnp(x, kparams):
    """Plain jnp path — faster than any kernel at tiny batches (uses packed params)."""
    w0_blk, b0_blk, wh_blk, bh_blk, wf_blk, bf_blk = kparams
    batch = x.shape[0]
    x2 = x.reshape(batch, -1).astype(jnp.float32)
    rows = -(-batch // PACK)
    x2 = jnp.pad(x2, ((0, rows * PACK - batch), (0, 0)))
    h = jnp.pad(x2.reshape(rows, PACKED_DIM), ((0, 0), (0, LANES - PACKED_DIM)))
    h = h @ w0_blk + b0_blk
    for i in range(HIDLAY):
        h = jnp.maximum(h @ wh_blk[i] + bh_blk[i], 0.0)
    out = h @ wf_blk + bf_blk
    return out[:, :PACK].reshape(-1, 1)[:batch]


def neural_network_forward(x, kparams):
    if x.shape[0] < PALLAS_MIN_BATCH:
        return neural_network_forward_jnp(x, kparams)
    return neural_network_forward_pallas(x, kparams)


def reference_forward(x, params):
    """Reference in original PyTorch layout (W as (out, in))."""
    w0, b0, wh, bh, wf, bf = params
    h = x.reshape(x.shape[0], -1).astype(jnp.float32)
    h = h @ w0.T + b0
    for i in range(HIDLAY):
        h = jnp.maximum(h @ wh[i].T + bh[i], 0.0)
    return h @ wf.T + bf


# ---------------------------------------------------------------------------
# Smoke test
# ---------------------------------------------------------------------------
if __name__ == "__main__":
    key = jax.random.PRNGKey(0)
    k_param, k_x = jax.random.split(key)
    params = make_params(k_param)
    kparams = prepare_kernel_params(params)   # one-time layout prep

    fwd = jax.jit(neural_network_forward_pallas)

    # Small batch (exercises the kernel directly even though tiny).
    batch = 8
    x = jax.random.normal(k_x, (batch, IN_DIM), jnp.float32)
    out = jax.block_until_ready(fwd(x, kparams))
    ref = reference_forward(x, params)
    assert out.shape == (batch, 1), out.shape
    assert jnp.allclose(out, ref, atol=1e-5, rtol=1e-5), float(jnp.max(jnp.abs(out - ref)))

    # Batch not a multiple of the 12-sample pack (padding path).
    batch2 = 37
    x2 = jax.random.normal(jax.random.PRNGKey(1), (batch2, IN_DIM), jnp.float32)
    out2 = jax.block_until_ready(fwd(x2, kparams))
    ref2 = reference_forward(x2, params)
    assert out2.shape == (batch2, 1), out2.shape
    assert jnp.allclose(out2, ref2, atol=1e-5, rtol=1e-5), float(jnp.max(jnp.abs(out2 - ref2)))

    # Larger batch: multiple grid steps (grid > 1) plus row padding.
    batch3 = 7000
    x3 = jax.random.normal(jax.random.PRNGKey(2), (batch3, IN_DIM), jnp.float32)
    out3 = jax.block_until_ready(fwd(x3, kparams))
    ref3 = reference_forward(x3, params)
    assert out3.shape == (batch3, 1), out3.shape
    assert jnp.allclose(out3, ref3, atol=1e-5, rtol=1e-5), float(jnp.max(jnp.abs(out3 - ref3)))

    print("KERNEL_OK")
</pallas_src>

<mosaic_0001>
module attributes {stable_mosaic.version = 11 : i64} {
  func.func @mlp_kernel(%arg0: i32, %arg1: memref<8x128xf32, #tpu.memory_space<vmem>>, %arg2: memref<128x128xf32, #tpu.memory_space<vmem>>, %arg3: memref<1x128xf32, #tpu.memory_space<vmem>>, %arg4: memref<5x128x128xf32, #tpu.memory_space<vmem>>, %arg5: memref<5x1x128xf32, #tpu.memory_space<vmem>>, %arg6: memref<128x128xf32, #tpu.memory_space<vmem>>, %arg7: memref<1x128xf32, #tpu.memory_space<vmem>>, %arg8: memref<8x128xf32, #tpu.memory_space<vmem>>) attributes {dimension_semantics = [#tpu.dimension_semantics<parallel>], iteration_bounds = array<i64: 1>, scalar_prefetch = 0 : i64, scratch_operands = 0 : i64, tpu.core_type = #tpu.core_type<tc>, window_params = [{transform_indices = @transform_0, window_bounds = array<i64: 8, 128>}, {pipeline_mode = #tpu.pipeline_mode<synchronous>, transform_indices = @transform_1, window_bounds = array<i64: 128, 128>}, {pipeline_mode = #tpu.pipeline_mode<synchronous>, transform_indices = @transform_2, window_bounds = array<i64: 1, 128>}, {pipeline_mode = #tpu.pipeline_mode<synchronous>, transform_indices = @transform_3, window_bounds = array<i64: 5, 128, 128>}, {pipeline_mode = #tpu.pipeline_mode<synchronous>, transform_indices = @transform_4, window_bounds = array<i64: 5, 1, 128>}, {pipeline_mode = #tpu.pipeline_mode<synchronous>, transform_indices = @transform_5, window_bounds = array<i64: 128, 128>}, {pipeline_mode = #tpu.pipeline_mode<synchronous>, transform_indices = @transform_6, window_bounds = array<i64: 1, 128>}, {transform_indices = @transform_7, window_bounds = array<i64: 8, 128>}]} {
    %c0 = arith.constant 0 : index
    %c0_0 = arith.constant 0 : index
    %0 = vector.load %arg1[%c0, %c0_0] : memref<8x128xf32, #tpu.memory_space<vmem>>, vector<8x128xf32>
    %c0_1 = arith.constant 0 : index
    %c0_2 = arith.constant 0 : index
    %1 = vector.load %arg2[%c0_1, %c0_2] : memref<128x128xf32, #tpu.memory_space<vmem>>, vector<128x128xf32>
    %cst = arith.constant dense<0.000000e+00> : vector<8x128xf32>
    %2 = tpu.matmul %0, %1, %cst {dimension_numbers = #tpu.dot_dimension_numbers<[1], [0], [0], [1], [0, 0, 1, 1], [], []>} : vector<8x128xf32>, vector<128x128xf32>, vector<8x128xf32> -> vector<8x128xf32>
    %c0_3 = arith.constant 0 : index
    %c0_4 = arith.constant 0 : index
    %3 = vector.load %arg3[%c0_3, %c0_4] : memref<1x128xf32, #tpu.memory_space<vmem>>, vector<1x128xf32>
    %4 = vector.broadcast %3 : vector<1x128xf32> to vector<8x128xf32>
    %5 = arith.addf %2, %4 : vector<8x128xf32>
    %c0_5 = arith.constant 0 : index
    %c0_6 = arith.constant 0 : index
    %c0_7 = arith.constant 0 : index
    %6 = vector.load %arg4[%c0_5, %c0_6, %c0_7] : memref<5x128x128xf32, #tpu.memory_space<vmem>>, vector<1x128x128xf32>
    %7 = vector.shape_cast %6 : vector<1x128x128xf32> to vector<128x128xf32>
    %cst_8 = arith.constant dense<0.000000e+00> : vector<8x128xf32>
    %8 = tpu.matmul %5, %7, %cst_8 {dimension_numbers = #tpu.dot_dimension_numbers<[1], [0], [0], [1], [0, 0, 1, 1], [], []>} : vector<8x128xf32>, vector<128x128xf32>, vector<8x128xf32> -> vector<8x128xf32>
    %c0_9 = arith.constant 0 : index
    %c0_10 = arith.constant 0 : index
    %c0_11 = arith.constant 0 : index
    %9 = vector.load %arg5[%c0_9, %c0_10, %c0_11] : memref<5x1x128xf32, #tpu.memory_space<vmem>>, vector<1x1x128xf32>
    %10 = vector.shape_cast %9 : vector<1x1x128xf32> to vector<1x128xf32>
    %11 = vector.broadcast %10 : vector<1x128xf32> to vector<8x128xf32>
    %12 = arith.addf %8, %11 : vector<8x128xf32>
    %cst_12 = arith.constant 0.000000e+00 : f32
    %13 = vector.broadcast %cst_12 : f32 to vector<8x128xf32>
    %14 = arith.maximumf %12, %13 : vector<8x128xf32>
    %c1 = arith.constant 1 : index
    %c0_13 = arith.constant 0 : index
    %c0_14 = arith.constant 0 : index
    %15 = vector.load %arg4[%c1, %c0_13, %c0_14] : memref<5x128x128xf32, #tpu.memory_space<vmem>>, vector<1x128x128xf32>
    %16 = vector.shape_cast %15 : vector<1x128x128xf32> to vector<128x128xf32>
    %cst_15 = arith.constant dense<0.000000e+00> : vector<8x128xf32>
    %17 = tpu.matmul %14, %16, %cst_15 {dimension_numbers = #tpu.dot_dimension_numbers<[1], [0], [0], [1], [0, 0, 1, 1], [], []>} : vector<8x128xf32>, vector<128x128xf32>, vector<8x128xf32> -> vector<8x128xf32>
    %c1_16 = arith.constant 1 : index
    %c0_17 = arith.constant 0 : index
    %c0_18 = arith.constant 0 : index
    %18 = vector.load %arg5[%c1_16, %c0_17, %c0_18] : memref<5x1x128xf32, #tpu.memory_space<vmem>>, vector<1x1x128xf32>
    %19 = vector.shape_cast %18 : vector<1x1x128xf32> to vector<1x128xf32>
    %20 = vector.broadcast %19 : vector<1x128xf32> to vector<8x128xf32>
    %21 = arith.addf %17, %20 : vector<8x128xf32>
    %cst_19 = arith.constant 0.000000e+00 : f32
    %22 = vector.broadcast %cst_19 : f32 to vector<8x128xf32>
    %23 = arith.maximumf %21, %22 : vector<8x128xf32>
    %c2 = arith.constant 2 : index
    %c0_20 = arith.constant 0 : index
    %c0_21 = arith.constant 0 : index
    %24 = vector.load %arg4[%c2, %c0_20, %c0_21] : memref<5x128x128xf32, #tpu.memory_space<vmem>>, vector<1x128x128xf32>
    %25 = vector.shape_cast %24 : vector<1x128x128xf32> to vector<128x128xf32>
    %cst_22 = arith.constant dense<0.000000e+00> : vector<8x128xf32>
    %26 = tpu.matmul %23, %25, %cst_22 {dimension_numbers = #tpu.dot_dimension_numbers<[1], [0], [0], [1], [0, 0, 1, 1], [], []>} : vector<8x128xf32>, vector<128x128xf32>, vector<8x128xf32> -> vector<8x128xf32>
    %c2_23 = arith.constant 2 : index
    %c0_24 = arith.constant 0 : index
    %c0_25 = arith.constant 0 : index
    %27 = vector.load %arg5[%c2_23, %c0_24, %c0_25] : memref<5x1x128xf32, #tpu.memory_space<vmem>>, vector<1x1x128xf32>
    %28 = vector.shape_cast %27 : vector<1x1x128xf32> to vector<1x128xf32>
    %29 = vector.broadcast %28 : vector<1x128xf32> to vector<8x128xf32>
    %30 = arith.addf %26, %29 : vector<8x128xf32>
    %cst_26 = arith.constant 0.000000e+00 : f32
    %31 = vector.broadcast %cst_26 : f32 to vector<8x128xf32>
    %32 = arith.maximumf %30, %31 : vector<8x128xf32>
    %c3 = arith.constant 3 : index
    %c0_27 = arith.constant 0 : index
    %c0_28 = arith.constant 0 : index
    %33 = vector.load %arg4[%c3, %c0_27, %c0_28] : memref<5x128x128xf32, #tpu.memory_space<vmem>>, vector<1x128x128xf32>
    %34 = vector.shape_cast %33 : vector<1x128x128xf32> to vector<128x128xf32>
    %cst_29 = arith.constant dense<0.000000e+00> : vector<8x128xf32>
    %35 = tpu.matmul %32, %34, %cst_29 {dimension_numbers = #tpu.dot_dimension_numbers<[1], [0], [0], [1], [0, 0, 1, 1], [], []>} : vector<8x128xf32>, vector<128x128xf32>, vector<8x128xf32> -> vector<8x128xf32>
    %c3_30 = arith.constant 3 : index
    %c0_31 = arith.constant 0 : index
    %c0_32 = arith.constant 0 : index
    %36 = vector.load %arg5[%c3_30, %c0_31, %c0_32] : memref<5x1x128xf32, #tpu.memory_space<vmem>>, vector<1x1x128xf32>
    %37 = vector.shape_cast %36 : vector<1x1x128xf32> to vector<1x128xf32>
    %38 = vector.broadcast %37 : vector<1x128xf32> to vector<8x128xf32>
    %39 = arith.addf %35, %38 : vector<8x128xf32>
    %cst_33 = arith.constant 0.000000e+00 : f32
    %40 = vector.broadcast %cst_33 : f32 to vector<8x128xf32>
    %41 = arith.maximumf %39, %40 : vector<8x128xf32>
    %c4 = arith.constant 4 : index
    %c0_34 = arith.constant 0 : index
    %c0_35 = arith.constant 0 : index
    %42 = vector.load %arg4[%c4, %c0_34, %c0_35] : memref<5x128x128xf32, #tpu.memory_space<vmem>>, vector<1x128x128xf32>
    %43 = vector.shape_cast %42 : vector<1x128x128xf32> to vector<128x128xf32>
    %cst_36 = arith.constant dense<0.000000e+00> : vector<8x128xf32>
    %44 = tpu.matmul %41, %43, %cst_36 {dimension_numbers = #tpu.dot_dimension_numbers<[1], [0], [0], [1], [0, 0, 1, 1], [], []>} : vector<8x128xf32>, vector<128x128xf32>, vector<8x128xf32> -> vector<8x128xf32>
    %c4_37 = arith.constant 4 : index
    %c0_38 = arith.constant 0 : index
    %c0_39 = arith.constant 0 : index
    %45 = vector.load %arg5[%c4_37, %c0_38, %c0_39] : memref<5x1x128xf32, #tpu.memory_space<vmem>>, vector<1x1x128xf32>
    %46 = vector.shape_cast %45 : vector<1x1x128xf32> to vector<1x128xf32>
    %47 = vector.broadcast %46 : vector<1x128xf32> to vector<8x128xf32>
    %48 = arith.addf %44, %47 : vector<8x128xf32>
    %cst_40 = arith.constant 0.000000e+00 : f32
    %49 = vector.broadcast %cst_40 : f32 to vector<8x128xf32>
    %50 = arith.maximumf %48, %49 : vector<8x128xf32>
    %c0_41 = arith.constant 0 : index
    %c0_42 = arith.constant 0 : index
    %51 = vector.load %arg6[%c0_41, %c0_42] : memref<128x128xf32, #tpu.memory_space<vmem>>, vector<128x128xf32>
    %cst_43 = arith.constant dense<0.000000e+00> : vector<8x128xf32>
    %52 = tpu.matmul %50, %51, %cst_43 {dimension_numbers = #tpu.dot_dimension_numbers<[1], [0], [0], [1], [0, 0, 1, 1], [], []>} : vector<8x128xf32>, vector<128x128xf32>, vector<8x128xf32> -> vector<8x128xf32>
    %c0_44 = arith.constant 0 : index
    %c0_45 = arith.constant 0 : index
    %53 = vector.load %arg7[%c0_44, %c0_45] : memref<1x128xf32, #tpu.memory_space<vmem>>, vector<1x128xf32>
    %54 = vector.broadcast %53 : vector<1x128xf32> to vector<8x128xf32>
    %55 = arith.addf %52, %54 : vector<8x128xf32>
    %c0_46 = arith.constant 0 : index
    %c0_47 = arith.constant 0 : index
    %56 = vector.load %arg8[%c0_46, %c0_47] : memref<8x128xf32, #tpu.memory_space<vmem>>, vector<8x128xf32>
    tpu.vector_store %arg8[%c0_46, %c0_47], %55 {strides = array<i32>} : memref<8x128xf32, #tpu.memory_space<vmem>>, vector<8x128xf32>,
    return
  }
  func.func @transform_0(%arg0: i32) -> (i32, i32) {
    %c0_i32 = arith.constant 0 : i32
    %c0_i32_0 = arith.constant 0 : i32
    return %arg0, %c0_i32 : i32, i32
  }
  func.func @transform_1(%arg0: i32) -> (i32, i32) {
    %c0_i32 = arith.constant 0 : i32
    %c0_i32_0 = arith.constant 0 : i32
    %c0_i32_1 = arith.constant 0 : i32
    return %c0_i32, %c0_i32_0 : i32, i32
  }
  func.func @transform_2(%arg0: i32) -> (i32, i32) {
    %c0_i32 = arith.constant 0 : i32
    %c0_i32_0 = arith.constant 0 : i32
    %c0_i32_1 = arith.constant 0 : i32
    return %c0_i32, %c0_i32_0 : i32, i32
  }
  func.func @transform_3(%arg0: i32) -> (i32, i32, i32) {
    %c0_i32 = arith.constant 0 : i32
    %c0_i32_0 = arith.constant 0 : i32
    %c0_i32_1 = arith.constant 0 : i32
    %c0_i32_2 = arith.constant 0 : i32
    return %c0_i32, %c0_i32_0, %c0_i32_1 : i32, i32, i32
  }
  func.func @transform_4(%arg0: i32) -> (i32, i32, i32) {
    %c0_i32 = arith.constant 0 : i32
    %c0_i32_0 = arith.constant 0 : i32
    %c0_i32_1 = arith.constant 0 : i32
    %c0_i32_2 = arith.constant 0 : i32
    return %c0_i32, %c0_i32_0, %c0_i32_1 : i32, i32, i32
  }
  func.func @transform_5(%arg0: i32) -> (i32, i32) {
    %c0_i32 = arith.constant 0 : i32
    %c0_i32_0 = arith.constant 0 : i32
    %c0_i32_1 = arith.constant 0 : i32
    return %c0_i32, %c0_i32_0 : i32, i32
  }
  func.func @transform_6(%arg0: i32) -> (i32, i32) {
    %c0_i32 = arith.constant 0 : i32
    %c0_i32_0 = arith.constant 0 : i32
    %c0_i32_1 = arith.constant 0 : i32
    return %c0_i32, %c0_i32_0 : i32, i32
  }
  func.func @transform_7(%arg0: i32) -> (i32, i32) {
    %c0_i32 = arith.constant 0 : i32
    %c0_i32_0 = arith.constant 0 : i32
    return %arg0, %c0_i32 : i32, i32
  }
}

</mosaic_0001>

<llo_original>
// kernel: neural_network_forward_pallas.1
$region0: #{neural_network_forward_pallas.1}
  #allocation0 [shape = 'u32[]', space=smem, size = 0x4, offset = 0x4, fixed_abs, tag = 'smem constant byte address 0x4 - core index']
  #allocation1 [shape = 'u32[72,128]{1,0:T(1,128)}', space=vmem, size = 0x9000, scoped, tag = 'internal scratch']
  %s0 = inlined_call_operand.vmem [shape: f32[8,128], index: 0, kind: input, shape index: {}]
  %s1 = inlined_call_operand.vmem [shape: f32[128,128], index: 1, kind: input, shape index: {}]
  %s2 = inlined_call_operand.vmem [shape: f32[1,128], index: 2, kind: input, shape index: {}]
  %s3 = inlined_call_operand.hbm [shape: f32[5,128,128], index: 3, kind: input, shape index: {}]
  %s4 = inlined_call_operand.vmem [shape: f32[5,1,128], index: 4, kind: input, shape index: {}]
  %s5 = inlined_call_operand.hbm [shape: f32[128,128], index: 5, kind: input, shape index: {}]
  %s6 = inlined_call_operand.vmem [shape: f32[1,128], index: 6, kind: input, shape index: {}]
  %s7 = inlined_call_operand.vmem [shape: f32[8,128], index: 7, kind: output, shape index: {}]
  %s8 = sld [smem:[#allocation0]]
  $region46: #{neural_network_forward_pallas.1} parent=0
    _
  %s10 = ssub.s32 1, %s8
  %s11 = scalar_select 0, %s10, %s8
  $region1: #{neural_network_forward_pallas.1} parent=0
    #allocation2 [shape = 'u8[327680]{0}', space=vmem, size = 0x50000, scoped, tag = 'input window, operand 3, single buffered']
    #allocation3 [shape = 's32[1]{0}', space=sflag, size = 0x4, scoped, tag = 'scoped memory for neural_network_forward_pallas.1']
    #allocation4 [shape = 'u8[65536]{0}', space=vmem, size = 0x10000, scoped, tag = 'input window, operand 5, single buffered']
    #allocation5 [shape = 's32[1]{0}', space=sflag, size = 0x4, scoped, tag = 'scoped memory for neural_network_forward_pallas.1']
    %12 = vsyncpa [#allocation3], 0
    %13 = vsyncpa [#allocation5], 0
    // Predicated region
    $region2: #{neural_network_forward_pallas.1} parent=1 // pred_check
      _
    $region3: #{neural_network_forward_pallas.1} parent=1 // pred_check_branch
      %15 = sbr.rel (0) target = $region5
    $region4: #{neural_network_forward_pallas.1} parent=1 // pred_region
      _
    $region5: #{neural_network_forward_pallas.1} parent=1 // pred_fallthru
      _
    // Predicated region
    $region6: #{neural_network_forward_pallas.1} parent=1 // pred_check
      _
    $region7: #{neural_network_forward_pallas.1} parent=1 // pred_check_branch
      %17 = sbr.rel (0) target = $region9
    $region8: #{neural_network_forward_pallas.1} parent=1 // pred_region
      _
    $region9: #{neural_network_forward_pallas.1} parent=1 // pred_fallthru
      _
    // Predicated region
    $region10: #{neural_network_forward_pallas.1} parent=1 // pred_check
      _
    $region11: #{neural_network_forward_pallas.1} parent=1 // pred_check_branch
      %19 = sbr.rel (0) target = $region13
    $region12: #{neural_network_forward_pallas.1} parent=1 // pred_region
      _
    $region13: #{neural_network_forward_pallas.1} parent=1 // pred_fallthru
      _
    // Predicated region
    $region14: #{neural_network_forward_pallas.1} parent=1 // pred_check
      _
    $region15: #{neural_network_forward_pallas.1} parent=1 // pred_check_branch
      %21 = sbr.rel (0) target = $region17
    $region16: #{neural_network_forward_pallas.1} parent=1 // pred_region
      %23 = vsyncadd [#allocation3], 0
      %s24 = sshll.u32 %s3, 4
      %s25 = int_to_ptr.hbm [resolvable:$true] %s24
      %s26 = sshll.u32 [#allocation2], 4
      %s27 = int_to_ptr.vmem [resolvable:$true] %s26
      %32 = dma.hbm_to_vmem [thread:$0]  %s25, 10240, %s27, [#allocation3], 128, 128, 8
    $region17: #{neural_network_forward_pallas.1} parent=1 // pred_fallthru
      _
    // Predicated region
    $region18: #{neural_network_forward_pallas.1} parent=1 // pred_check
      _
    $region19: #{neural_network_forward_pallas.1} parent=1 // pred_check_branch
      %34 = sbr.rel (0) target = $region21
    $region20: #{neural_network_forward_pallas.1} parent=1 // pred_region
      _
    $region21: #{neural_network_forward_pallas.1} parent=1 // pred_fallthru
      _
    // Predicated region
    $region22: #{neural_network_forward_pallas.1} parent=1 // pred_check
      _
    $region23: #{neural_network_forward_pallas.1} parent=1 // pred_check_branch
      %36 = sbr.rel (0) target = $region25
    $region24: #{neural_network_forward_pallas.1} parent=1 // pred_region
      %38 = vsyncadd [#allocation5], 0
      %s39 = sshll.u32 %s5, 4
      %s40 = int_to_ptr.hbm [resolvable:$true] %s39
      %s41 = sshll.u32 [#allocation4], 4
      %s42 = int_to_ptr.vmem [resolvable:$true] %s41
      %47 = dma.hbm_to_vmem [thread:$0]  %s40, 2048, %s42, [#allocation5], 128, 128, 8
    $region25: #{neural_network_forward_pallas.1} parent=1 // pred_fallthru
      _
    // Predicated region
    $region26: #{neural_network_forward_pallas.1} parent=1 // pred_check
      _
    $region27: #{neural_network_forward_pallas.1} parent=1 // pred_check_branch
      %49 = sbr.rel (0) target = $region29
    $region28: #{neural_network_forward_pallas.1} parent=1 // pred_region
      _
    $region29: #{neural_network_forward_pallas.1} parent=1 // pred_fallthru
      _
    // Predicated region
    $region30: #{neural_network_forward_pallas.1} parent=1 // pred_check
      _
    $region31: #{neural_network_forward_pallas.1} parent=1 // pred_check_branch
      %51 = sbr.rel (0) target = $region33
    $region32: #{neural_network_forward_pallas.1} parent=1 // pred_region
      %53 = dma.done [#allocation3], 10240
    $region33: #{neural_network_forward_pallas.1} parent=1 // pred_fallthru
      _
    // Predicated region
    $region34: #{neural_network_forward_pallas.1} parent=1 // pred_check
      _
    $region35: #{neural_network_forward_pallas.1} parent=1 // pred_check_branch
      %55 = sbr.rel (0) target = $region37
    $region36: #{neural_network_forward_pallas.1} parent=1 // pred_region
      %57 = dma.done [#allocation5], 2048
    $region37: #{neural_network_forward_pallas.1} parent=1 // pred_fallthru
      _
    %v58 = vld [vmem:[%s0] sm:$0xff]
    %v59 = vld [vmem:[%s1] sm:$0xff]
    %v60 = vld [vmem:[%s1 + $0x8] sm:$0xff]
    %v61 = vld [vmem:[%s1 + $0x10] sm:$0xff]
    %v62 = vld [vmem:[%s1 + $0x18] sm:$0xff]
    %v63 = vld [vmem:[%s1 + $0x20] sm:$0xff]
    %v64 = vld [vmem:[%s1 + $0x28] sm:$0xff]
    %v65 = vld [vmem:[%s1 + $0x30] sm:$0xff]
    %v66 = vld [vmem:[%s1 + $0x38] sm:$0xff]
    %v67 = vld [vmem:[%s1 + $0x40] sm:$0xff]
    %v68 = vld [vmem:[%s1 + $0x48] sm:$0xff]
    %v69 = vld [vmem:[%s1 + $0x50] sm:$0xff]
    %v70 = vld [vmem:[%s1 + $0x58] sm:$0xff]
    %v71 = vld [vmem:[%s1 + $0x60] sm:$0xff]
    %v72 = vld [vmem:[%s1 + $0x68] sm:$0xff]
    %v73 = vld [vmem:[%s1 + $0x70] sm:$0xff]
    %v74 = vld [vmem:[%s1 + $0x78] sm:$0xff]
    %v75 = vld [vmem:[%s2] sm:$0x1]
    %v77 = vperm.slane %v75, 0
    %79 = vmatpush.msra.mxu0 %v74
    %80 = vmatpush.msra.mxu0 %v73
    %81 = vmatpush.msra.mxu0 %v72
    %82 = vmatpush.msra.mxu0 %v71
    %83 = vmatpush.msra.mxu0 %v70
    %84 = vmatpush.msra.mxu0 %v69
    %85 = vmatpush.msra.mxu0 %v68
    %86 = vmatpush.msra.mxu0 %v67
    %87 = vmatpush.msra.mxu0 %v66
    %88 = vmatpush.msra.mxu0 %v65
    %89 = vmatpush.msra.mxu0 %v64
    %90 = vmatpush.msra.mxu0 %v63
    %91 = vmatpush.msra.mxu0 %v62
    %92 = vmatpush.msra.mxu0 %v61
    %93 = vmatpush.msra.mxu0 %v60
    %94 = vmatpush.msra.mxu0 %v59
    %95 = vmatmul.f32.gmra.mxu0 %v58
    %v96 = vpop.f32.mrf.mxu0
    %v97 = vadd.f32 %v77, %v96
    %98 = vdwg.mxu0
    %v99 = vld [vmem:[#allocation2] sm:$0xff]
    %v100 = vld [vmem:[#allocation2 + $0x8] sm:$0xff]
    %v101 = vld [vmem:[#allocation2 + $0x10] sm:$0xff]
    %v102 = vld [vmem:[#allocation2 + $0x18] sm:$0xff]
    %v103 = vld [vmem:[#allocation2 + $0x20] sm:$0xff]
    %v104 = vld [vmem:[#allocation2 + $0x28] sm:$0xff]
    %v105 = vld [vmem:[#allocation2 + $0x30] sm:$0xff]
    %v106 = vld [vmem:[#allocation2 + $0x38] sm:$0xff]
    %v107 = vld [vmem:[#allocation2 + $0x40] sm:$0xff]
    %v108 = vld [vmem:[#allocation2 + $0x48] sm:$0xff]
    %v109 = vld [vmem:[#allocation2 + $0x50] sm:$0xff]
    %v110 = vld [vmem:[#allocation2 + $0x58] sm:$0xff]
    %v111 = vld [vmem:[#allocation2 + $0x60] sm:$0xff]
    %v112 = vld [vmem:[#allocation2 + $0x68] sm:$0xff]
    %v113 = vld [vmem:[#allocation2 + $0x70] sm:$0xff]
    %v114 = vld [vmem:[#allocation2 + $0x78] sm:$0xff]
    %v115 = vld [vmem:[%s4] sm:$0x1]
    %v117 = vperm.slane %v115, 0
    %119 = vmatpush.msra.mxu0 %v114
    %120 = vmatpush.msra.mxu0 %v113
    %121 = vmatpush.msra.mxu0 %v112
    %122 = vmatpush.msra.mxu0 %v111
    %123 = vmatpush.msra.mxu0 %v110
    %124 = vmatpush.msra.mxu0 %v109
    %125 = vmatpush.msra.mxu0 %v108
    %126 = vmatpush.msra.mxu0 %v107
    %127 = vmatpush.msra.mxu0 %v106
    %128 = vmatpush.msra.mxu0 %v105
    %129 = vmatpush.msra.mxu0 %v104
    %130 = vmatpush.msra.mxu0 %v103
    %131 = vmatpush.msra.mxu0 %v102
    %132 = vmatpush.msra.mxu0 %v101
    %133 = vmatpush.msra.mxu0 %v100
    %134 = vmatpush.msra.mxu0 %v99
    %135 = vmatmul.f32.gmra.mxu0 %v97
    %v136 = vpop.f32.mrf.mxu0
    %v137 = vadd.f32 %v117, %v136
    %138 = vdwg.mxu0
    %v139 = vmax.f32 %v137, 0.0
    %s140 = scalar_lea.vmem [#allocation2], 128
    %v141 = vld [vmem:[%s140] sm:$0xff]
    %v142 = vld [vmem:[%s140 + $0x8] sm:$0xff]
    %v143 = vld [vmem:[%s140 + $0x10] sm:$0xff]
    %v144 = vld [vmem:[%s140 + $0x18] sm:$0xff]
    %v145 = vld [vmem:[%s140 + $0x20] sm:$0xff]
    %v146 = vld [vmem:[%s140 + $0x28] sm:$0xff]
    %v147 = vld [vmem:[%s140 + $0x30] sm:$0xff]
    %v148 = vld [vmem:[%s140 + $0x38] sm:$0xff]
    %v149 = vld [vmem:[%s140 + $0x40] sm:$0xff]
    %v150 = vld [vmem:[%s140 + $0x48] sm:$0xff]
    %v151 = vld [vmem:[%s140 + $0x50] sm:$0xff]
    %v152 = vld [vmem:[%s140 + $0x58] sm:$0xff]
    %v153 = vld [vmem:[%s140 + $0x60] sm:$0xff]
    %v154 = vld [vmem:[%s140 + $0x68] sm:$0xff]
    %v155 = vld [vmem:[%s140 + $0x70] sm:$0xff]
    %v156 = vld [vmem:[%s140 + $0x78] sm:$0xff]
    %s157 = scalar_lea.vmem %s4, 1
    %v158 = vld [vmem:[%s157] sm:$0x1]
    %v160 = vperm.slane %v158, 0
    %162 = vmatpush.msra.mxu0 %v156
    %163 = vmatpush.msra.mxu0 %v155
    %164 = vmatpush.msra.mxu0 %v154
    %165 = vmatpush.msra.mxu0 %v153
    %166 = vmatpush.msra.mxu0 %v152
    %167 = vmatpush.msra.mxu0 %v151
    %168 = vmatpush.msra.mxu0 %v150
    %169 = vmatpush.msra.mxu0 %v149
    %170 = vmatpush.msra.mxu0 %v148
    %171 = vmatpush.msra.mxu0 %v147
    %172 = vmatpush.msra.mxu0 %v146
    %173 = vmatpush.msra.mxu0 %v145
    %174 = vmatpush.msra.mxu0 %v144
    %175 = vmatpush.msra.mxu0 %v143
    %176 = vmatpush.msra.mxu0 %v142
    %177 = vmatpush.msra.mxu0 %v141
    %178 = vmatmul.f32.gmra.mxu0 %v139
    %v179 = vpop.f32.mrf.mxu0
    %v180 = vadd.f32 %v160, %v179
    %181 = vdwg.mxu0
    %v182 = vmax.f32 %v180, 0.0
    %s183 = scalar_lea.vmem [#allocation2], 256
    %v184 = vld [vmem:[%s183] sm:$0xff]
    %v185 = vld [vmem:[%s183 + $0x8] sm:$0xff]
    %v186 = vld [vmem:[%s183 + $0x10] sm:$0xff]
    %v187 = vld [vmem:[%s183 + $0x18] sm:$0xff]
    %v188 = vld [vmem:[%s183 + $0x20] sm:$0xff]
    %v189 = vld [vmem:[%s183 + $0x28] sm:$0xff]
    %v190 = vld [vmem:[%s183 + $0x30] sm:$0xff]
    %v191 = vld [vmem:[%s183 + $0x38] sm:$0xff]
    %v192 = vld [vmem:[%s183 + $0x40] sm:$0xff]
    %v193 = vld [vmem:[%s183 + $0x48] sm:$0xff]
    %v194 = vld [vmem:[%s183 + $0x50] sm:$0xff]
    %v195 = vld [vmem:[%s183 + $0x58] sm:$0xff]
    %v196 = vld [vmem:[%s183 + $0x60] sm:$0xff]
    %v197 = vld [vmem:[%s183 + $0x68] sm:$0xff]
    %v198 = vld [vmem:[%s183 + $0x70] sm:$0xff]
    %v199 = vld [vmem:[%s183 + $0x78] sm:$0xff]
    %s200 = scalar_lea.vmem %s4, 2
    %v201 = vld [vmem:[%s200] sm:$0x1]
    %v203 = vperm.slane %v201, 0
    %205 = vmatpush.msra.mxu0 %v199
    %206 = vmatpush.msra.mxu0 %v198
    %207 = vmatpush.msra.mxu0 %v197
    %208 = vmatpush.msra.mxu0 %v196
    %209 = vmatpush.msra.mxu0 %v195
    %210 = vmatpush.msra.mxu0 %v194
    %211 = vmatpush.msra.mxu0 %v193
    %212 = vmatpush.msra.mxu0 %v192
    %213 = vmatpush.msra.mxu0 %v191
    %214 = vmatpush.msra.mxu0 %v190
    %215 = vmatpush.msra.mxu0 %v189
    %216 = vmatpush.msra.mxu0 %v188
    %217 = vmatpush.msra.mxu0 %v187
    %218 = vmatpush.msra.mxu0 %v186
    %219 = vmatpush.msra.mxu0 %v185
    %220 = vmatpush.msra.mxu0 %v184
    %221 = vmatmul.f32.gmra.mxu0 %v182
    %v222 = vpop.f32.mrf.mxu0
    %v223 = vadd.f32 %v203, %v222
    %224 = vdwg.mxu0
    %v225 = vmax.f32 %v223, 0.0
    %s226 = scalar_lea.vmem [#allocation2], 384
    %v227 = vld [vmem:[%s226] sm:$0xff]
    %v228 = vld [vmem:[%s226 + $0x8] sm:$0xff]
    %v229 = vld [vmem:[%s226 + $0x10] sm:$0xff]
    %v230 = vld [vmem:[%s226 + $0x18] sm:$0xff]
    %v231 = vld [vmem:[%s226 + $0x20] sm:$0xff]
    %v232 = vld [vmem:[%s226 + $0x28] sm:$0xff]
    %v233 = vld [vmem:[%s226 + $0x30] sm:$0xff]
    %v234 = vld [vmem:[%s226 + $0x38] sm:$0xff]
    %v235 = vld [vmem:[%s226 + $0x40] sm:$0xff]
    %v236 = vld [vmem:[%s226 + $0x48] sm:$0xff]
    %v237 = vld [vmem:[%s226 + $0x50] sm:$0xff]
    %v238 = vld [vmem:[%s226 + $0x58] sm:$0xff]
    %v239 = vld [vmem:[%s226 + $0x60] sm:$0xff]
    %v240 = vld [vmem:[%s226 + $0x68] sm:$0xff]
    %v241 = vld [vmem:[%s226 + $0x70] sm:$0xff]
    %v242 = vld [vmem:[%s226 + $0x78] sm:$0xff]
    %s243 = scalar_lea.vmem %s4, 3
    %v244 = vld [vmem:[%s243] sm:$0x1]
    %v246 = vperm.slane %v244, 0
    %248 = vmatpush.msra.mxu0 %v242
    %249 = vmatpush.msra.mxu0 %v241
    %250 = vmatpush.msra.mxu0 %v240
    %251 = vmatpush.msra.mxu0 %v239
    %252 = vmatpush.msra.mxu0 %v238
    %253 = vmatpush.msra.mxu0 %v237
    %254 = vmatpush.msra.mxu0 %v236
    %255 = vmatpush.msra.mxu0 %v235
    %256 = vmatpush.msra.mxu0 %v234
    %257 = vmatpush.msra.mxu0 %v233
    %258 = vmatpush.msra.mxu0 %v232
    %259 = vmatpush.msra.mxu0 %v231
    %260 = vmatpush.msra.mxu0 %v230
    %261 = vmatpush.msra.mxu0 %v229
    %262 = vmatpush.msra.mxu0 %v228
    %263 = vmatpush.msra.mxu0 %v227
    %264 = vmatmul.f32.gmra.mxu0 %v225
    %v265 = vpop.f32.mrf.mxu0
    %v266 = vadd.f32 %v246, %v265
    %267 = vdwg.mxu0
    %v268 = vmax.f32 %v266, 0.0
    %s269 = scalar_lea.vmem [#allocation2], 512
    %v270 = vld [vmem:[%s269] sm:$0xff]
    %v271 = vld [vmem:[%s269 + $0x8] sm:$0xff]
    %v272 = vld [vmem:[%s269 + $0x10] sm:$0xff]
    %v273 = vld [vmem:[%s269 + $0x18] sm:$0xff]
    %v274 = vld [vmem:[%s269 + $0x20] sm:$0xff]
    %v275 = vld [vmem:[%s269 + $0x28] sm:$0xff]
    %v276 = vld [vmem:[%s269 + $0x30] sm:$0xff]
    %v277 = vld [vmem:[%s269 + $0x38] sm:$0xff]
    %v278 = vld [vmem:[%s269 + $0x40] sm:$0xff]
    %v279 = vld [vmem:[%s269 + $0x48] sm:$0xff]
    %v280 = vld [vmem:[%s269 + $0x50] sm:$0xff]
    %v281 = vld [vmem:[%s269 + $0x58] sm:$0xff]
    %v282 = vld [vmem:[%s269 + $0x60] sm:$0xff]
    %v283 = vld [vmem:[%s269 + $0x68] sm:$0xff]
    %v284 = vld [vmem:[%s269 + $0x70] sm:$0xff]
    %v285 = vld [vmem:[%s269 + $0x78] sm:$0xff]
    %s286 = scalar_lea.vmem %s4, 4
    %v287 = vld [vmem:[%s286] sm:$0x1]
    %v289 = vperm.slane %v287, 0
    %291 = vmatpush.msra.mxu0 %v285
    %292 = vmatpush.msra.mxu0 %v284
    %293 = vmatpush.msra.mxu0 %v283
    %294 = vmatpush.msra.mxu0 %v282
    %295 = vmatpush.msra.mxu0 %v281
    %296 = vmatpush.msra.mxu0 %v280
    %297 = vmatpush.msra.mxu0 %v279
    %298 = vmatpush.msra.mxu0 %v278
    %299 = vmatpush.msra.mxu0 %v277
    %300 = vmatpush.msra.mxu0 %v276
    %301 = vmatpush.msra.mxu0 %v275
    %302 = vmatpush.msra.mxu0 %v274
    %303 = vmatpush.msra.mxu0 %v273
    %304 = vmatpush.msra.mxu0 %v272
    %305 = vmatpush.msra.mxu0 %v271
    %306 = vmatpush.msra.mxu0 %v270
    %307 = vmatmul.f32.gmra.mxu0 %v268
    %v308 = vpop.f32.mrf.mxu0
    %v309 = vadd.f32 %v289, %v308
    %310 = vdwg.mxu0
    %v311 = vmax.f32 %v309, 0.0
    %v312 = vld [vmem:[#allocation4] sm:$0xff]
    %v313 = vld [vmem:[#allocation4 + $0x8] sm:$0xff]
    %v314 = vld [vmem:[#allocation4 + $0x10] sm:$0xff]
    %v315 = vld [vmem:[#allocation4 + $0x18] sm:$0xff]
    %v316 = vld [vmem:[#allocation4 + $0x20] sm:$0xff]
    %v317 = vld [vmem:[#allocation4 + $0x28] sm:$0xff]
    %v318 = vld [vmem:[#allocation4 + $0x30] sm:$0xff]
    %v319 = vld [vmem:[#allocation4 + $0x38] sm:$0xff]
    %v320 = vld [vmem:[#allocation4 + $0x40] sm:$0xff]
    %v321 = vld [vmem:[#allocation4 + $0x48] sm:$0xff]
    %v322 = vld [vmem:[#allocation4 + $0x50] sm:$0xff]
    %v323 = vld [vmem:[#allocation4 + $0x58] sm:$0xff]
    %v324 = vld [vmem:[#allocation4 + $0x60] sm:$0xff]
    %v325 = vld [vmem:[#allocation4 + $0x68] sm:$0xff]
    %v326 = vld [vmem:[#allocation4 + $0x70] sm:$0xff]
    %v327 = vld [vmem:[#allocation4 + $0x78] sm:$0xff]
    %v328 = vld [vmem:[%s6] sm:$0x1]
    %v330 = vperm.slane %v328, 0
    %332 = vmatpush.msra.mxu0 %v327
    %333 = vmatpush.msra.mxu0 %v326
    %334 = vmatpush.msra.mxu0 %v325
    %335 = vmatpush.msra.mxu0 %v324
    %336 = vmatpush.msra.mxu0 %v323
    %337 = vmatpush.msra.mxu0 %v322
    %338 = vmatpush.msra.mxu0 %v321
    %339 = vmatpush.msra.mxu0 %v320
    %340 = vmatpush.msra.mxu0 %v319
    %341 = vmatpush.msra.mxu0 %v318
    %342 = vmatpush.msra.mxu0 %v317
    %343 = vmatpush.msra.mxu0 %v316
    %344 = vmatpush.msra.mxu0 %v315
    %345 = vmatpush.msra.mxu0 %v314
    %346 = vmatpush.msra.mxu0 %v313
    %347 = vmatpush.msra.mxu0 %v312
    %348 = vmatmul.f32.gmra.mxu0 %v311
    %v349 = vpop.f32.mrf.mxu0
    %v350 = vadd.f32 %v330, %v349
    %351 = vdwg.mxu0
    %352 = vst [vmem:[%s7] sm:$0xff] %v350
    // Predicated region
    $region38: #{neural_network_forward_pallas.1} parent=1 // pred_check
      _
    $region39: #{neural_network_forward_pallas.1} parent=1 // pred_check_branch
      %354 = sbr.rel (0) target = $region41
    $region40: #{neural_network_forward_pallas.1} parent=1 // pred_region
      _
    $region41: #{neural_network_forward_pallas.1} parent=1 // pred_fallthru
      _
    // Predicated region
    $region42: #{neural_network_forward_pallas.1} parent=1 // pred_check
      _
    $region43: #{neural_network_forward_pallas.1} parent=1 // pred_check_branch
      %356 = sbr.rel (0) target = $region45
    $region44: #{neural_network_forward_pallas.1} parent=1 // pred_region
      _
    $region45: #{neural_network_forward_pallas.1} parent=1 // pred_fallthru
      _
    %357 = vsyncpa [#allocation3], 1
    %358 = vsyncpa [#allocation5], 1

</llo_original>
